<compile_context>
chip_gen: v7x
topology: tpu7x:2x2x1
jax: 0.10.0
libtpu: 0.0.40
codegen_flags: <defaults>
</compile_context>

<pallas_src>
import functools
import math

import numpy as np

import jax
import jax.numpy as jnp
from jax.experimental import pallas as pl
from jax.experimental.pallas import tpu as pltpu

_LANES = 512  # lane-dense flat-buffer width (multiple of 128)


def _round_up(x: int, m: int) -> int:
    return -(-x // m) * m


def _ema_row_tile_cap() -> int:
    # Keep 3 double-buffered (tile, 512) f32 buffers under the default scoped
    # VMEM limit: v5e has 16 MiB (-> ~12 MiB at 1024 rows), v6e/v7x have
    # 32 MiB (-> ~24 MiB at 2048 rows).
    try:
        kind = jax.devices()[0].device_kind.lower()
    except Exception:
        return 1024
    if "v5 lite" in kind or "v5e" in kind or "v5lite" in kind:
        return 1024
    return 2048


def _plan_row_tile(raw_rows: int):
    """Return (padded_rows, row_tile) for the flat parameter buffer."""
    cap = _ema_row_tile_cap()
    rows = _round_up(max(raw_rows, 1), 16)
    # Big tiles for HBM roofline, but aim for >= ~4 grid steps so the
    # 'parallel' row axis can be sharded across v7x's two TensorCores.
    tile = min(cap, max(16, _round_up(-(-rows // 4), 16)))
    rows = _round_up(rows, tile)
    return rows, tile


# ---------------------------------------------------------------------------
# Fused EMA update:  ema <- ema + (1 - decay) * (live - ema)   (== lerp)
# ---------------------------------------------------------------------------
def _fused_lerp_kernel(decay_ref, ema_ref, live_ref, out_ref):
    d = decay_ref[0, 0]                        # SMEM scalar read
    e = ema_ref[...].astype(jnp.float32)       # EMA master is f32
    p = live_ref[...].astype(jnp.float32)      # live may be bf16; cast is free
    out_ref[...] = (e + (1.0 - d) * (p - e)).astype(out_ref.dtype)


@functools.partial(jax.jit, static_argnums=(3,), donate_argnums=(0,))
def _fused_ema_update(ema_flat, live_flat, decay, row_tile):
    rows, lanes = ema_flat.shape
    decay2d = jnp.asarray(decay, jnp.float32).reshape(1, 1)
    return pl.pallas_call(
        _fused_lerp_kernel,
        out_shape=jax.ShapeDtypeStruct((rows, lanes), ema_flat.dtype),
        grid=(rows // row_tile,),
        in_specs=[
            pl.BlockSpec(memory_space=pltpu.MemorySpace.SMEM),   # decay scalar
            pl.BlockSpec((row_tile, lanes), lambda i: (i, 0)),    # ema tile
            pl.BlockSpec((row_tile, lanes), lambda i: (i, 0)),    # live tile
        ],
        out_specs=pl.BlockSpec((row_tile, lanes), lambda i: (i, 0)),
        input_output_aliases={1: 0},   # EMA master updated in place
        compiler_params=pltpu.CompilerParams(
            dimension_semantics=("parallel",)),
    )(decay2d, ema_flat, live_flat)


# ---------------------------------------------------------------------------
# Delegated forward: y = x @ W + b  (W stored pre-transposed as [H_in, H_out])
# ---------------------------------------------------------------------------
def _linear_kernel_single_k(x_ref, w_ref, b_ref, o_ref):
    # K fits one tile: single dot, bias fused in epilogue, no scratch.
    acc = jnp.dot(x_ref[...], w_ref[...], preferred_element_type=jnp.float32)
    o_ref[...] = (acc + b_ref[...].astype(jnp.float32)).astype(o_ref.dtype)


def _linear_kernel_multi_k(x_ref, w_ref, b_ref, o_ref, acc_ref):
    @pl.when(pl.program_id(2) == 0)
    def _():
        acc_ref[...] = jnp.zeros_like(acc_ref)

    acc_ref[...] += jnp.dot(x_ref[...], w_ref[...],
                            preferred_element_type=jnp.float32)

    @pl.when(pl.program_id(2) == pl.num_programs(2) - 1)
    def _():
        o_ref[...] = (acc_ref[...] + b_ref[...].astype(jnp.float32)).astype(
            o_ref.dtype)


def _pick_divisor_tile(dim: int, candidates) -> int:
    for c in candidates:
        if dim % c == 0:
            return c
    return dim  # full (unblocked) extent


def _pick_parallel_tile(dim: int, candidates) -> int:
    # Largest candidate that divides `dim` AND leaves >= 2 blocks (so the
    # parallel axis can be split across v7x's two TensorCores); otherwise the
    # largest divisor; otherwise the full extent.
    best = None
    for c in candidates:
        if dim % c == 0:
            if best is None:
                best = c
            if dim // c >= 2:
                return c
    return best if best is not None else dim


@jax.jit
def _linear_forward(x, w_bf16, b2d):
    M, K = x.shape
    K2, N = w_bf16.shape
    assert K == K2 and b2d.shape == (1, N)
    out_dtype = x.dtype
    x_bf16 = x.astype(jnp.bfloat16)   # cast once in the wrapper, not per tile

    tm = _pick_divisor_tile(M, (256, 128, 64, 32, 16, 8))
    tn = _pick_parallel_tile(N, (512, 256, 128))
    tk = _pick_divisor_tile(K, (1024, 512, 256, 128))

    if K // tk == 1:
        # Common Linear(hidden, hidden) case: drop the reduction grid axis.
        return pl.pallas_call(
            _linear_kernel_single_k,
            out_shape=jax.ShapeDtypeStruct((M, N), out_dtype),
            grid=(M // tm, N // tn),
            in_specs=[
                pl.BlockSpec((tm, K), lambda i, j: (i, 0)),
                pl.BlockSpec((K, tn), lambda i, j: (0, j)),
                pl.BlockSpec((1, tn), lambda i, j: (0, j)),
            ],
            out_specs=pl.BlockSpec((tm, tn), lambda i, j: (i, j)),
            compiler_params=pltpu.CompilerParams(
                dimension_semantics=("parallel", "parallel")),
        )(x_bf16, w_bf16, b2d)

    return pl.pallas_call(
        _linear_kernel_multi_k,
        out_shape=jax.ShapeDtypeStruct((M, N), out_dtype),
        grid=(M // tm, N // tn, K // tk),
        in_specs=[
            pl.BlockSpec((tm, tk), lambda i, j, k: (i, k)),
            pl.BlockSpec((tk, tn), lambda i, j, k: (k, j)),
            pl.BlockSpec((1, tn), lambda i, j, k: (0, j)),
        ],
        out_specs=pl.BlockSpec((tm, tn), lambda i, j, k: (i, j)),
        scratch_shapes=[pltpu.VMEM((tm, tn), jnp.float32)],
        compiler_params=pltpu.CompilerParams(
            dimension_semantics=("parallel", "parallel", "arbitrary")),
    )(x_bf16, w_bf16, b2d)


# ---------------------------------------------------------------------------
# Flat-buffer parameter layout (lane-dense, padded to the EMA row tile)
# ---------------------------------------------------------------------------
def _plan_layout(params: dict):
    keys = sorted(params.keys())
    metas, off = [], 0
    for k in keys:
        v = jnp.asarray(params[k])
        n = max(1, math.prod(v.shape))
        metas.append((k, tuple(v.shape), np.dtype(v.dtype), off, n))
        off += n
    return metas, off


def _pack(params: dict, metas, total: int, rows: int, dtype) -> jax.Array:
    pieces = [jnp.ravel(jnp.asarray(params[k])).astype(dtype)
              for k, _, _, _, _ in metas]
    flat = jnp.concatenate(pieces)
    flat = jnp.pad(flat, (0, rows * _LANES - total))
    return flat.reshape(rows, _LANES)


class FlatLinear:
    """Linear(H_in, H_out): y = x @ w_t + b.

    Parameters live permanently in one lane-dense flat buffer so the EMA
    update never re-packs them; cached views (incl. a bf16 shadow of w_t for
    the MXU) are rebuilt lazily only after the buffer changes.
    """

    def __init__(self, params: dict, param_dtype=jnp.float32):
        metas, total = _plan_layout(params)
        rows, row_tile = _plan_row_tile(-(-total // _LANES))
        self.metas = metas
        self.total = total
        self.rows = rows
        self.row_tile = row_tile
        self.param_dtype = np.dtype(param_dtype)
        self.flat = _pack(params, metas, total, rows, self.param_dtype)
        self._invalidate()

    @classmethod
    def _from_flat(cls, flat, metas, total, rows, row_tile, param_dtype):
        obj = cls.__new__(cls)
        obj.metas = metas
        obj.total = total
        obj.rows = rows
        obj.row_tile = row_tile
        obj.param_dtype = np.dtype(param_dtype)
        obj.flat = flat
        obj._invalidate()
        return obj

    def _invalidate(self):
        self._views = None
        self._w_bf16 = None
        self._b2d = None

    def load_params(self, params: dict):
        """Re-pack params (demo 'training step' path, not the EMA hot path)."""
        metas, _ = _plan_layout(params)
        assert metas == self.metas, "parameter layout/dtype mismatch"
        self.flat = _pack(params, metas, self.total, self.rows,
                          self.param_dtype)
        self._invalidate()

    def params(self) -> dict:
        if self._views is None:
            flat = self.flat.reshape(-1)
            self._views = {
                k: flat[off:off + n].reshape(shape).astype(dt)
                for k, shape, dt, off, n in self.metas
            }
        return self._views

    def _fwd_views(self):
        if self._w_bf16 is None:
            p = self.params()
            self._w_bf16 = p["w_t"].astype(jnp.bfloat16)   # bf16 MXU shadow
            self._b2d = p["b"].astype(jnp.float32).reshape(1, -1)
        return self._w_bf16, self._b2d

    def __call__(self, x: jax.Array) -> jax.Array:
        w_bf16, b2d = self._fwd_views()
        return _linear_forward(x, w_bf16, b2d)


# ---------------------------------------------------------------------------
# EMA wrapper (port of teal.nn.ema.EMA)
# ---------------------------------------------------------------------------
class EMA:
    """EMA of a FlatLinear; master copy is one flat f32 buffer."""

    def __init__(self, module: FlatLinear, decay: float = 0.99):
        self.decay = float(decay)
        self._live_metas = module.metas
        # analogue of copy.deepcopy(module): f32 master copy, same layout
        self.ema_module = FlatLinear._from_flat(
            jnp.array(module.flat, dtype=jnp.float32),
            module.metas, module.total, module.rows, module.row_tile,
            module.param_dtype)

    def update(self, module: FlatLinear, decay=None):
        d = self.decay if decay is None else float(decay)
        assert module.metas == self._live_metas, \
            "parameter layout/dtype mismatch"
        assert module.flat.shape == self.ema_module.flat.shape
        # ONE pallas_call over the whole parameter set, EMA updated in place.
        self.ema_module.flat = _fused_ema_update(
            self.ema_module.flat, module.flat, jnp.float32(d),
            self.ema_module.row_tile)
        self.ema_module._invalidate()

    def params(self) -> dict:
        return self.ema_module.params()

    def __call__(self, *args, **kwargs):
        return self.ema_module(*args, **kwargs)


# ---------------------------------------------------------------------------
# Demo / self-check
# ---------------------------------------------------------------------------
if __name__ == "__main__":
    key = jax.random.PRNGKey(0)
    B, H = 8, 128  # lane-aligned small demo shapes

    k0, k1, k2, k3, k4 = jax.random.split(key, 5)
    w0 = jax.random.normal(k0, (H, H), jnp.float32) * 0.1   # [H_in, H_out]
    b0 = jax.random.normal(k1, (H,), jnp.float32) * 0.01

    live = FlatLinear({"w_t": w0, "b": b0})
    ema = EMA(live, decay=0.99)

    # simulate a training step changing the live params (outside EMA hot path)
    w1 = w0 + jax.random.normal(k2, (H, H), jnp.float32) * 0.05
    b1 = b0 + jax.random.normal(k3, (H,), jnp.float32) * 0.05
    live.load_params({"w_t": w1, "b": b1})

    ema.update(live)

    # reference EMA params (pure JAX, f32)
    ref_w = 0.99 * w0 + 0.01 * w1
    ref_b = 0.99 * b0 + 0.01 * b1
    p = ema.params()
    assert jnp.allclose(p["w_t"], ref_w, atol=1e-5, rtol=1e-5), "EMA w mismatch"
    assert jnp.allclose(p["b"], ref_b, atol=1e-5, rtol=1e-5), "EMA b mismatch"

    # delegated forward (bf16 MXU inputs, f32 accumulation -> loosened tol)
    x = jax.random.normal(k4, (B, H), jnp.float32)
    y = jax.block_until_ready(ema(x))
    y_ref = x @ ref_w + ref_b
    assert jnp.allclose(y, y_ref, atol=5e-2, rtol=5e-2), "forward mismatch"

    # second update with a different decay (traced scalar -> no recompile)
    ema.update(live, decay=0.5)
    p2 = ema.params()
    ref_w2 = 0.5 * ref_w + 0.5 * w1
    ref_b2 = 0.5 * ref_b + 0.5 * b1
    assert jnp.allclose(p2["w_t"], ref_w2, atol=1e-5, rtol=1e-5), "EMA w2 mismatch"
    assert jnp.allclose(p2["b"], ref_b2, atol=1e-5, rtol=1e-5), "EMA b2 mismatch"
    jax.block_until_ready(p2["w_t"])

    print("KERNEL_OK")
</pallas_src>

<mosaic_0001>
module attributes {stable_mosaic.version = 11 : i64} {
  func.func @_fused_lerp_kernel(%arg0: i32, %arg1: memref<1x1xf32, #tpu.memory_space<smem>>, %arg2: memref<16x512xf32, #tpu.memory_space<vmem>>, %arg3: memref<16x512xf32, #tpu.memory_space<vmem>>, %arg4: memref<16x512xf32, #tpu.memory_space<vmem>>) attributes {dimension_semantics = [#tpu.dimension_semantics<parallel>], iteration_bounds = array<i64: 3>, scalar_prefetch = 0 : i64, scratch_operands = 0 : i64, tpu.core_type = #tpu.core_type<tc>, window_params = [{transform_indices = @transform_0, window_bounds = array<i64: 1, 1>}, {transform_indices = @transform_1, window_bounds = array<i64: 16, 512>}, {transform_indices = @transform_2, window_bounds = array<i64: 16, 512>}, {transform_indices = @transform_3, window_bounds = array<i64: 16, 512>}]} {
    %c0 = arith.constant 0 : index
    %c0_0 = arith.constant 0 : index
    %0 = memref.load %arg1[%c0, %c0_0] : memref<1x1xf32, #tpu.memory_space<smem>>
    %c0_1 = arith.constant 0 : index
    %c0_2 = arith.constant 0 : index
    %1 = vector.load %arg2[%c0_1, %c0_2] : memref<16x512xf32, #tpu.memory_space<vmem>>, vector<16x512xf32>
    %c0_3 = arith.constant 0 : index
    %c0_4 = arith.constant 0 : index
    %2 = vector.load %arg3[%c0_3, %c0_4] : memref<16x512xf32, #tpu.memory_space<vmem>>, vector<16x512xf32>
    %cst = arith.constant 1.000000e+00 : f32
    %3 = arith.subf %cst, %0 : f32
    %4 = arith.subf %2, %1 : vector<16x512xf32>
    %5 = vector.broadcast %3 : f32 to vector<16x512xf32>
    %6 = arith.mulf %5, %4 : vector<16x512xf32>
    %7 = arith.addf %1, %6 : vector<16x512xf32>
    %c0_5 = arith.constant 0 : index
    %c0_6 = arith.constant 0 : index
    %8 = vector.load %arg4[%c0_5, %c0_6] : memref<16x512xf32, #tpu.memory_space<vmem>>, vector<16x512xf32>
    tpu.vector_store %arg4[%c0_5, %c0_6], %7 {strides = array<i32>} : memref<16x512xf32, #tpu.memory_space<vmem>>, vector<16x512xf32>,
    return
  }
  func.func @transform_0(%arg0: i32) -> (i32, i32) {
    %c0_i32 = arith.constant 0 : i32
    %c0_i32_0 = arith.constant 0 : i32
    %c0_i32_1 = arith.constant 0 : i32
    return %c0_i32, %c0_i32_0 : i32, i32
  }
  func.func @transform_1(%arg0: i32) -> (i32, i32) {
    %c0_i32 = arith.constant 0 : i32
    %c0_i32_0 = arith.constant 0 : i32
    return %arg0, %c0_i32 : i32, i32
  }
  func.func @transform_2(%arg0: i32) -> (i32, i32) {
    %c0_i32 = arith.constant 0 : i32
    %c0_i32_0 = arith.constant 0 : i32
    return %arg0, %c0_i32 : i32, i32
  }
  func.func @transform_3(%arg0: i32) -> (i32, i32) {
    %c0_i32 = arith.constant 0 : i32
    %c0_i32_0 = arith.constant 0 : i32
    return %arg0, %c0_i32 : i32, i32
  }
}

</mosaic_0001>

<llo_original>
// kernel: _fused_ema_update.1
$region0: #{_fused_ema_update.1}
  #allocation0 [shape = 'u32[]', space=smem, size = 0x4, offset = 0x4, fixed_abs, tag = 'smem constant byte address 0x4 - core index']
  #allocation1 [shape = 'u32[144,128]{1,0:T(1,128)}', space=vmem, size = 0x12000, scoped, tag = 'internal scratch']
  #allocation2 [shape = 'f32[1,1]{1,0:T(1,128)S(6)}', space=smem, size = 0x200, scoped, tag = 'scoped memory for _fused_ema_update.1']
  %s0 = inlined_call_operand.<no memory space> [shape: f32[1,1], index: 0, kind: input, shape index: {}]
  %s1 = inlined_call_operand.hbm [shape: f32[48,512], index: 1, kind: input, shape index: {}, may-alias: {1,3}]
  %s2 = inlined_call_operand.hbm [shape: f32[48,512], index: 2, kind: input, shape index: {}]
  %s3 = inlined_call_operand.hbm [shape: f32[48,512], index: 3, kind: output, shape index: {}, may-alias: {1,3}]
  %s4 = sld [smem:[#allocation0]]
  $region53: #{_fused_ema_update.1} parent=0
    _
  %s6 = ssub.s32 1, %s4
  %s7 = scalar_select 0, %s6, %s4
  %8 = sst [smem:[#allocation2]] %s0
  $region1: #{_fused_ema_update.1} parent=0
    #allocation3 [shape = 'u8[65536]{0}', space=vmem, size = 0x10000, scoped, tag = 'input window, operand 1']
    #allocation4 [shape = 's32[2]{0}', space=sflag, size = 0x8, scoped, tag = 'scoped memory for _fused_ema_update.1']
    #allocation5 [shape = 's32[2]{0}', space=sflag, size = 0x8, scoped, tag = 'scoped memory for _fused_ema_update.1']
    #allocation6 [shape = 'u8[65536]{0}', space=vmem, size = 0x10000, scoped, tag = 'input window, operand 2']
    #allocation7 [shape = 's32[2]{0}', space=sflag, size = 0x8, scoped, tag = 'scoped memory for _fused_ema_update.1']
    #allocation8 [shape = 'u8[65536]{0}', space=vmem, size = 0x10000, scoped, tag = 'output window, operand 0']
    %9 = vsyncpa [#allocation4], 0
    %s10 = scalar_lea.sflag [#allocation4], 1
    %11 = vsyncpa %s10, 0
    %12 = vsyncpa [#allocation7], 0
    %s13 = scalar_lea.sflag [#allocation7], 1
    %14 = vsyncpa %s13, 0
    %15 = vsyncpa [#allocation5], 0
    %s16 = scalar_lea.sflag [#allocation5], 1
    %17 = vsyncpa %s16, 0
    loop: start=0, step=1, limit=5
    $region2: #{_fused_ema_update.1} parent=1 // loop_pre_header
      _
    $region3: #{_fused_ema_update.1} parent=1 // loop_header
      %s19 = sphi 0, %s23
      %p20 = scmp.ge.s32.totalorder %s19, 5
      %s27 = sphi 0, %s27
      %s29 = sphi 0, %s27
      %s30 = sphi 0, %s29
      %s44 = sphi 0, %s30
      %s50 = sphi 0, %s52
      %s53 = sphi 0, %s50
      %s54 = sphi 0, %s53
      %s70 = sphi 0, %s54
      %s76 = sphi 0, %s78
      %s79 = sphi 0, %s76
      %s80 = sphi 0, %s79
      %s96 = sphi 0, %s80
      %s102 = sphi 0, %s104
      %s105 = sphi 0, %s102
      %s106 = sphi 0, %s105
      %s122 = sphi 0, %s106
    $region4: #{_fused_ema_update.1} parent=1 // loop_header_branch
      %22 = sbr.rel (%p20) target = $region8
    $region5: #{_fused_ema_update.1} parent=1 // loop_body
      %s24 = ssub.s32 %s19, 1
      %s25 = ssub.s32 %s19, 2
      %s26 = sadd.s32 %s19, 1
      %s28 = sadd.s32 %s27, 1
      %p31 = scmp.eq.s32.totalorder %s19, 2
      %p32 = scmp.ne.s32.totalorder %s27, %s29
      %p33 = scmp.eq.s32.totalorder %s19, 0
      %p34 = por %p32, %p33
      %p35 = scmp.ne.s32.totalorder %s27, %s29
      %p36 = scmp.eq.s32.totalorder %s24, 2
      %p37 = por %p35, %p36
      %p38 = scmp.ne.s32.totalorder %s29, %s30
      %p39 = scmp.eq.s32.totalorder %s24, 0
      %p40 = por %p38, %p39
      %p41 = scmp.ne.s32.totalorder %s29, %s30
      %p42 = scmp.eq.s32.totalorder %s25, 2
      %p43 = por %p41, %p42
      %p45 = scmp.ne.s32.totalorder %s30, %s44
      %p46 = scmp.eq.s32.totalorder %s25, 0
      %p47 = por %p45, %p46
      %s48 = ssub.s32 %s19, %s26
      %p49 = scmp.eq.s32.totalorder %s48, 0
      %s51 = sadd.s32 %s50, 1
      %s52 = scalar_select %p49, %s50, %s51
      %p55 = pneg %p49
      %p56 = scmp.eq.s32.totalorder %s19, 2
      %p57 = por %p55, %p56
      %p58 = scmp.ne.s32.totalorder %s50, %s53
      %p59 = scmp.eq.s32.totalorder %s19, 0
      %p60 = por %p58, %p59
      %p61 = scmp.ne.s32.totalorder %s50, %s53
      %p62 = scmp.eq.s32.totalorder %s24, 2
      %p63 = por %p61, %p62
      %p64 = scmp.ne.s32.totalorder %s53, %s54
      %p65 = scmp.eq.s32.totalorder %s24, 0
      %p66 = por %p64, %p65
      %p67 = scmp.ne.s32.totalorder %s53, %s54
      %p68 = scmp.eq.s32.totalorder %s25, 2
      %p69 = por %p67, %p68
      %p71 = scmp.ne.s32.totalorder %s54, %s70
      %p72 = scmp.eq.s32.totalorder %s25, 0
      %p73 = por %p71, %p72
      %s74 = ssub.s32 %s19, %s26
      %p75 = scmp.eq.s32.totalorder %s74, 0
      %s77 = sadd.s32 %s76, 1
      %s78 = scalar_select %p75, %s76, %s77
      %p81 = pneg %p75
      %p82 = scmp.eq.s32.totalorder %s19, 2
      %p83 = por %p81, %p82
      %p84 = scmp.ne.s32.totalorder %s76, %s79
      %p85 = scmp.eq.s32.totalorder %s19, 0
      %p86 = por %p84, %p85
      %p87 = scmp.ne.s32.totalorder %s76, %s79
      %p88 = scmp.eq.s32.totalorder %s24, 2
      %p89 = por %p87, %p88
      %p90 = scmp.ne.s32.totalorder %s79, %s80
      %p91 = scmp.eq.s32.totalorder %s24, 0
      %p92 = por %p90, %p91
      %p93 = scmp.ne.s32.totalorder %s79, %s80
      %p94 = scmp.eq.s32.totalorder %s25, 2
      %p95 = por %p93, %p94
      %p97 = scmp.ne.s32.totalorder %s80, %s96
      %p98 = scmp.eq.s32.totalorder %s25, 0
      %p99 = por %p97, %p98
      %s100 = ssub.s32 %s19, %s26
      %p101 = scmp.eq.s32.totalorder %s100, 0
      %s103 = sadd.s32 %s102, 1
      %s104 = scalar_select %p101, %s102, %s103
      %p107 = pneg %p101
      %p108 = scmp.eq.s32.totalorder %s19, 2
      %p109 = por %p107, %p108
      %p110 = scmp.ne.s32.totalorder %s102, %s105
      %p111 = scmp.eq.s32.totalorder %s19, 0
      %p112 = por %p110, %p111
      %p113 = scmp.ne.s32.totalorder %s102, %s105
      %p114 = scmp.eq.s32.totalorder %s24, 2
      %p115 = por %p113, %p114
      %p116 = scmp.ne.s32.totalorder %s105, %s106
      %p117 = scmp.eq.s32.totalorder %s24, 0
      %p118 = por %p116, %p117
      %p119 = scmp.ne.s32.totalorder %s105, %s106
      %p120 = scmp.eq.s32.totalorder %s25, 2
      %p121 = por %p119, %p120
      %p123 = scmp.ne.s32.totalorder %s106, %s122
      %p124 = scmp.eq.s32.totalorder %s25, 0
      %p125 = por %p123, %p124
      %p126 = scmp.le.s32.totalorder 1, %s19
      %p127 = scmp.lt.s32.totalorder %s19, 4
      %p128 = pnand %p126, %p127
      %p129 = pneg %p128
      // Predicated region
      $region9: #{_fused_ema_update.1} parent=5 // pred_check
        _
      $region10: #{_fused_ema_update.1} parent=5 // pred_check_branch
        %131 = sbr.rel (%p128) target = $region12
      $region11: #{_fused_ema_update.1} parent=5 // pred_region
        %s132 = ssub.s32 %s19, 1
        // Predicated region
        $region13: #{_fused_ema_update.1} parent=11 // pred_check
          %p133 = pneg %p40
        $region14: #{_fused_ema_update.1} parent=11 // pred_check_branch
          %135 = sbr.rel (%p133) target = $region16
        $region15: #{_fused_ema_update.1} parent=11 // pred_region
          _
        $region16: #{_fused_ema_update.1} parent=11 // pred_fallthru
          _
      $region12: #{_fused_ema_update.1} parent=5 // pred_fallthru
        _
      %p136 = scmp.lt.s32.totalorder %s19, 3
      // Predicated region
      $region17: #{_fused_ema_update.1} parent=5 // pred_check
        %p137 = pneg %p136
      $region18: #{_fused_ema_update.1} parent=5 // pred_check_branch
        %139 = sbr.rel (%p137) target = $region20
      $region19: #{_fused_ema_update.1} parent=5 // pred_region
        // Predicated region
        $region21: #{_fused_ema_update.1} parent=19 // pred_check
          %p140 = pneg %p60
        $region22: #{_fused_ema_update.1} parent=19 // pred_check_branch
          %142 = sbr.rel (%p140) target = $region24
        $region23: #{_fused_ema_update.1} parent=19 // pred_region
          %s143 = sand.u32 %s50, 1
          %s144 = scalar_lea.sflag [#allocation4], %s143
          %s145 = sand.u32 %s50, 1
          %s146 = smul.addr %s145, 64
          %s147 = scalar_lea.vmem [#allocation3], %s146
          %s148 = smul.u32 2, %s19
          %s150 = ssub.s32 1024, 1024
          %151 = vsyncadd %s144, %s150
          %s152 = smul.addr %s148, 4
          %s153 = smul.addr %s152, 128
          %s154 = scalar_lea.hbm %s1, %s153
          %s155 = sshll.u32 %s147, 4
          %s156 = int_to_ptr.vmem [resolvable:$true] %s155
          %161 = dma.hbm_to_vmem [thread:$0]  %s154, 1024, %s156, %s144, 512, 512, 32
        $region24: #{_fused_ema_update.1} parent=19 // pred_fallthru
          _
        // Predicated region
        $region25: #{_fused_ema_update.1} parent=19 // pred_check
          %p162 = pneg %p86
        $region26: #{_fused_ema_update.1} parent=19 // pred_check_branch
          %164 = sbr.rel (%p162) target = $region28
        $region27: #{_fused_ema_update.1} parent=19 // pred_region
          %s165 = sand.u32 %s76, 1
          %s166 = scalar_lea.sflag [#allocation7], %s165
          %s167 = sand.u32 %s76, 1
          %s168 = smul.addr %s167, 64
          %s169 = scalar_lea.vmem [#allocation6], %s168
          %s170 = smul.u32 2, %s19
          %s172 = ssub.s32 1024, 1024
          %173 = vsyncadd %s166, %s172
          %s174 = smul.addr %s170, 4
          %s175 = smul.addr %s174, 128
          %s176 = scalar_lea.hbm %s2, %s175
          %s177 = sshll.u32 %s169, 4
          %s178 = int_to_ptr.vmem [resolvable:$true] %s177
          %183 = dma.hbm_to_vmem [thread:$0]  %s176, 1024, %s178, %s166, 512, 512, 32
        $region28: #{_fused_ema_update.1} parent=19 // pred_fallthru
          _
      $region20: #{_fused_ema_update.1} parent=5 // pred_fallthru
        _
      %p184 = scmp.le.s32.totalorder 1, %s19
      %p185 = scmp.lt.s32.totalorder %s19, 4
      %p186 = pnand %p184, %p185
      %p187 = pneg %p186
      // Predicated region
      $region29: #{_fused_ema_update.1} parent=5 // pred_check
        _
      $region30: #{_fused_ema_update.1} parent=5 // pred_check_branch
        %189 = sbr.rel (%p186) target = $region32
      $region31: #{_fused_ema_update.1} parent=5 // pred_region
        %s190 = ssub.s32 %s19, 1
        %s191 = sand.u32 %s53, 1
        %s192 = scalar_lea.sflag [#allocation4], %s191
        %s193 = sand.u32 %s53, 1
        %s194 = smul.addr %s193, 64
        %s195 = scalar_lea.vmem [#allocation3], %s194
        // Predicated region
        $region33: #{_fused_ema_update.1} parent=31 // pred_check
          %p196 = pneg %p66
        $region34: #{_fused_ema_update.1} parent=31 // pred_check_branch
          %198 = sbr.rel (%p196) target = $region36
        $region35: #{_fused_ema_update.1} parent=31 // pred_region
          %199 = dma.done %s192, 1024
        $region36: #{_fused_ema_update.1} parent=31 // pred_fallthru
          _
        %s200 = sand.u32 %s79, 1
        %s201 = scalar_lea.sflag [#allocation7], %s200
        %s202 = sand.u32 %s79, 1
        %s203 = smul.addr %s202, 64
        %s204 = scalar_lea.vmem [#allocation6], %s203
        // Predicated region
        $region37: #{_fused_ema_update.1} parent=31 // pred_check
          %p205 = pneg %p92
        $region38: #{_fused_ema_update.1} parent=31 // pred_check_branch
          %207 = sbr.rel (%p205) target = $region40
        $region39: #{_fused_ema_update.1} parent=31 // pred_region
          %208 = dma.done %s201, 1024
        $region40: #{_fused_ema_update.1} parent=31 // pred_fallthru
          _
        %p209 = pneg %p40
        %p210 = pneg %p37
        %s211 = sand.u32 %s53, 1
        %s212 = scalar_lea.sflag [#allocation4], %s211
        %s213 = sand.u32 %s53, 1
        %s214 = smul.addr %s213, 64
        %s215 = scalar_lea.vmem [#allocation3], %s214
        %p216 = pneg %p66
        %p217 = pneg %p63
        %s218 = sand.u32 %s79, 1
        %s219 = scalar_lea.sflag [#allocation7], %s218
        %s220 = sand.u32 %s79, 1
        %s221 = smul.addr %s220, 64
        %s222 = scalar_lea.vmem [#allocation6], %s221
        %p223 = pneg %p92
        %p224 = pneg %p89
        %p225 = pneg %p118
        %p226 = pneg %p115
        %s227 = sand.u32 %s105, 1
        %s228 = scalar_lea.sflag [#allocation5], %s227
        %s229 = sand.u32 %s105, 1
        %s230 = smul.addr %s229, 64
        %s231 = scalar_lea.vmem [#allocation8], %s230
        %s232 = smul.u32 2, %s24
        %s233 = smul.u32 2, %s24
        %s234 = smul.u32 2, %s24
        %s235 = sld [smem:[#allocation2]]
        %v236 = vld [vmem:[%s195] sm:$0xff]
        %v237 = vld [vmem:[%s195 + $0x8] sm:$0xff]
        %v238 = vld [vmem:[%s195 + $0x10] sm:$0xff]
        %v239 = vld [vmem:[%s195 + $0x18] sm:$0xff]
        %v240 = vld [vmem:[%s195 + $0x20] sm:$0xff]
        %v241 = vld [vmem:[%s195 + $0x28] sm:$0xff]
        %v242 = vld [vmem:[%s195 + $0x30] sm:$0xff]
        %v243 = vld [vmem:[%s195 + $0x38] sm:$0xff]
        %v244 = vld [vmem:[%s204] sm:$0xff]
        %v245 = vld [vmem:[%s204 + $0x8] sm:$0xff]
        %v246 = vld [vmem:[%s204 + $0x10] sm:$0xff]
        %v247 = vld [vmem:[%s204 + $0x18] sm:$0xff]
        %v248 = vld [vmem:[%s204 + $0x20] sm:$0xff]
        %v249 = vld [vmem:[%s204 + $0x28] sm:$0xff]
        %v250 = vld [vmem:[%s204 + $0x30] sm:$0xff]
        %v251 = vld [vmem:[%s204 + $0x38] sm:$0xff]
        %s252 = ssub.f32 1.0, %s235
        %v253 = vsub.f32 %v244, %v236
        %v254 = vsub.f32 %v245, %v237
        %v255 = vsub.f32 %v246, %v238
        %v256 = vsub.f32 %v247, %v239
        %v257 = vsub.f32 %v248, %v240
        %v258 = vsub.f32 %v249, %v241
        %v259 = vsub.f32 %v250, %v242
        %v260 = vsub.f32 %v251, %v243
        %v261 = vstv %s252
        %v262 = vmul.f32 %v261, %v253
        %v263 = vmul.f32 %v261, %v254
        %v264 = vmul.f32 %v261, %v255
        %v265 = vmul.f32 %v261, %v256
        %v266 = vmul.f32 %v261, %v257
        %v267 = vmul.f32 %v261, %v258
        %v268 = vmul.f32 %v261, %v259
        %v269 = vmul.f32 %v261, %v260
        %v270 = vadd.f32 %v236, %v262
        %v271 = vadd.f32 %v237, %v263
        %v272 = vadd.f32 %v238, %v264
        %v273 = vadd.f32 %v239, %v265
        %v274 = vadd.f32 %v240, %v266
        %v275 = vadd.f32 %v241, %v267
        %v276 = vadd.f32 %v242, %v268
        %v277 = vadd.f32 %v243, %v269
        %278 = vst [vmem:[%s231] sm:$0xff] %v270
        %279 = vst [vmem:[%s231 + $0x8] sm:$0xff] %v271
        %280 = vst [vmem:[%s231 + $0x10] sm:$0xff] %v272
        %281 = vst [vmem:[%s231 + $0x18] sm:$0xff] %v273
        %282 = vst [vmem:[%s231 + $0x20] sm:$0xff] %v274
        %283 = vst [vmem:[%s231 + $0x28] sm:$0xff] %v275
        %284 = vst [vmem:[%s231 + $0x30] sm:$0xff] %v276
        %285 = vst [vmem:[%s231 + $0x38] sm:$0xff] %v277
        %s286 = sand.u32 %s105, 1
        %s287 = scalar_lea.sflag [#allocation5], %s286
        %s288 = sand.u32 %s105, 1
        %s289 = smul.addr %s288, 64
        %s290 = scalar_lea.vmem [#allocation8], %s289
        // Predicated region
        $region41: #{_fused_ema_update.1} parent=31 // pred_check
          %p291 = pneg %p115
        $region42: #{_fused_ema_update.1} parent=31 // pred_check_branch
          %293 = sbr.rel (%p291) target = $region44
        $region43: #{_fused_ema_update.1} parent=31 // pred_region
          %s294 = smul.u32 2, %s24
          %s296 = ssub.s32 1024, 1024
          %297 = vsyncadd %s287, %s296
          %s298 = smul.addr %s294, 4
          %s299 = smul.addr %s298, 128
          %s300 = scalar_lea.hbm %s3, %s299
          %s301 = sshll.u32 %s290, 4
          %s302 = int_to_ptr.vmem [resolvable:$true] %s301
          %307 = dma.vmem_to_hbm [thread:$0]  %s302, 1024, %s300, %s287, 512, 512, 32
        $region44: #{_fused_ema_update.1} parent=31 // pred_fallthru
          _
      $region32: #{_fused_ema_update.1} parent=5 // pred_fallthru
        _
      %p308 = scmp.le.s32.totalorder 2, %s19
      // Predicated region
      $region45: #{_fused_ema_update.1} parent=5 // pred_check
        %p309 = pneg %p308
      $region46: #{_fused_ema_update.1} parent=5 // pred_check_branch
        %311 = sbr.rel (%p309) target = $region48
      $region47: #{_fused_ema_update.1} parent=5 // pred_region
        %s312 = ssub.s32 %s19, 2
        // Predicated region
        $region49: #{_fused_ema_update.1} parent=47 // pred_check
          %p313 = pneg %p121
        $region50: #{_fused_ema_update.1} parent=47 // pred_check_branch
          %315 = sbr.rel (%p313) target = $region52
        $region51: #{_fused_ema_update.1} parent=47 // pred_region
          %s316 = sand.u32 %s106, 1
          %s317 = scalar_lea.sflag [#allocation5], %s316
          %s318 = sand.u32 %s106, 1
          %s319 = smul.addr %s318, 64
          %s320 = scalar_lea.vmem [#allocation8], %s319
          %321 = dma.done %s317, 1024
        $region52: #{_fused_ema_update.1} parent=47 // pred_fallthru
          _
      $region48: #{_fused_ema_update.1} parent=5 // pred_fallthru
        _
    $region6: #{_fused_ema_update.1} parent=1 // loop_footer
      %s23 = sadd.s32 1, %s19
    $region7: #{_fused_ema_update.1} parent=1 // loop_footer_branch
      %18 = sbr.rel target = $region3
    $region8: #{_fused_ema_update.1} parent=1 // loop_exit
      _
    %322 = vsyncpa [#allocation4], 1
    %s323 = scalar_lea.sflag [#allocation4], 1
    %324 = vsyncpa %s323, 1
    %325 = vsyncpa [#allocation7], 1
    %s326 = scalar_lea.sflag [#allocation7], 1
    %327 = vsyncpa %s326, 1
    %328 = vsyncpa [#allocation5], 1
    %s329 = scalar_lea.sflag [#allocation5], 1
    %330 = vsyncpa %s329, 1

</llo_original>
